<compile_context>
chip_gen: v7x
topology: tpu7x:2x2x1
jax: 0.10.0
libtpu: 0.0.40
codegen_flags: <defaults>
</compile_context>

<pallas_src>
import functools

import jax
import jax.numpy as jnp
from jax.experimental import pallas as pl
from jax.experimental.pallas import tpu as pltpu


def _round_up(n: int, m: int) -> int:
    return ((n + m - 1) // m) * m


def _device_kind() -> str:
    try:
        return jax.devices()[0].device_kind.lower()
    except Exception:  # pragma: no cover - defensive (no backend yet)
        return ""


def _compute_dtype(kind: str):
    """bf16 tanh/MXU path on v6e/v7x (native bf16 VPU/EUP/MXU); f32 elsewhere."""
    return jnp.bfloat16 if ("v6" in kind or "v7" in kind) else jnp.float32


def _batch_tile(batch: int, compute_dtype, kind: str) -> int:
    """Pick the lane-axis batch tile.

    Large enough to amortize the ~0.35 us/step pipeline overhead, capped per
    generation so the double-buffered x/out blocks plus the (32, TB)
    intermediates fit VMEM (v7x has only 64 MiB), and on v7x small enough that
    the parallel grid axis has >= 2 tiles so both TensorCores get work.
    """
    cap = 32768 if compute_dtype == jnp.bfloat16 else 16384
    num_cores = 2 if "v7" in kind else 1
    want = max(1, -(-batch // num_cores))          # cdiv(batch, num_cores)
    return min(cap, _round_up(want, 128))


def _mlp_critic_kernel(xt_ref, w1_ref, b1_ref, w2_ref, b2_ref, w3_ref, b3_ref,
                       o_ref):
    """Fused 3-layer critic MLP in batch-on-lanes layout.

    xt_ref : (S, TB)   states, batch on the 128-lane axis (float32)
    w1_ref : (H, S)    layer-1 weight, PyTorch (out, in) layout (float32)
    b1_ref : (H, 1)    layer-1 bias column (float32)
    w2_ref : (H, H)    layer-2 weight (compute dtype: bf16 on v6e/v7x)
    b2_ref : (H, 1)    layer-2 bias column (float32)
    w3_ref : (H, 1)    layer-3 weight column (float32)
    b3_ref : (1,)      layer-3 bias scalar in SMEM (float32)
    o_ref  : (1, TB)   lane-dense state-value row (float32)
    """
    xt = xt_ref[...]                       # (S, TB) f32
    w1 = w1_ref[...]                       # (H, S)  f32
    w2 = w2_ref[...]                       # (H, H)  compute dtype
    cdt = w2.dtype
    s_dim = xt.shape[0]

    # Layer 1: K == state_dim (tiny) -> s_dim broadcast FMAs on the VPU, all in
    # f32 (VPU has slack; EUP/tanh is the bound).  Cast to the compute dtype
    # only at the tanh input so the EUP runs at its bf16 rate on v6e/v7x.
    h = w1[:, 0:1] * xt[0:1, :] + b1_ref[...]          # (H, TB) f32
    for k in range(1, s_dim):
        h = h + w1[:, k:k + 1] * xt[k:k + 1, :]
    h1 = jnp.tanh(h.astype(cdt))                       # (H, TB) cdt

    # Layer 2: MXU matmul (f32 accumulation), f32 bias add, tanh in compute dt.
    a2 = jnp.dot(w2, h1, preferred_element_type=jnp.float32)     # (H, TB) f32
    h2 = jnp.tanh((a2 + b2_ref[...]).astype(cdt))                # (H, TB) cdt

    # Layer 3: N == 1 -> VPU multiply + sublane reduction in f32; the result is
    # already lane-dense (1, TB), so the store is a full-width vst.
    v = jnp.sum(h2.astype(jnp.float32) * w3_ref[...], axis=0, keepdims=True)
    o_ref[...] = (v + b3_ref[0]).astype(o_ref.dtype)


def _critic_columns(xt, w1, b1, w2, b2, w3, b3, tb):
    """Run the fused kernel on xt: (S, BP) f32 with BP % tb == 0 -> (1, BP) f32."""
    s_dim, bp = xt.shape
    hidden = w1.shape[0]
    n_tiles = bp // tb
    kind = _device_kind()
    cdt = _compute_dtype(kind)
    # Raise the scoped VMEM limit for the large batch tiles; keep headroom on
    # v7x (64 MiB physical) and be generous on v5e/v6e (128 MiB physical).
    vmem_limit = (48 << 20) if "v7" in kind else (64 << 20)

    return pl.pallas_call(
        _mlp_critic_kernel,
        out_shape=jax.ShapeDtypeStruct((1, bp), jnp.float32),
        grid=(n_tiles,),
        in_specs=[
            # x tiles stream over the batch grid axis...
            pl.BlockSpec((s_dim, tb), lambda i: (0, i)),
            # ...weights/biases keep a constant block index -> VMEM-resident
            # (fetched once, default double-buffering everywhere).
            pl.BlockSpec((hidden, s_dim), lambda i: (0, 0)),
            pl.BlockSpec((hidden, 1), lambda i: (0, 0)),
            pl.BlockSpec((hidden, hidden), lambda i: (0, 0)),
            pl.BlockSpec((hidden, 1), lambda i: (0, 0)),
            pl.BlockSpec((hidden, 1), lambda i: (0, 0)),
            # b3 is a single scalar: SMEM, not a padded VMEM tile.
            pl.BlockSpec(memory_space=pltpu.MemorySpace.SMEM),
        ],
        out_specs=pl.BlockSpec((1, tb), lambda i: (0, i)),
        compiler_params=pltpu.CompilerParams(
            dimension_semantics=("parallel",),
            vmem_limit_bytes=vmem_limit,
        ),
    )(
        xt.astype(jnp.float32),                          # (S, BP)
        w1.astype(jnp.float32),                          # (H, S)
        b1.reshape(hidden, 1).astype(jnp.float32),       # (H, 1)
        w2.astype(cdt),                                  # (H, H)
        b2.reshape(hidden, 1).astype(jnp.float32),       # (H, 1)
        w3.reshape(hidden, 1).astype(jnp.float32),       # (H, 1)
        b3.reshape(1).astype(jnp.float32),               # (1,) -> SMEM scalar
    )


@functools.partial(jax.jit, static_argnames=("block_batch",))
def gaussian_critic_forward_t(xt, w1, b1, w2, b2, w3, b3, *, block_batch=None):
    """Batch-on-lanes entry point: xt is (state_dim, B) float32.

    Skips the transpose HBM pass entirely (use this when the caller controls
    layout).  Returns (B, 1).
    """
    s_dim, batch = xt.shape
    del s_dim
    kind = _device_kind()
    cdt = _compute_dtype(kind)
    tb = _batch_tile(batch, cdt, kind) if block_batch is None else block_batch
    tb = _round_up(max(int(tb), 1), 128)
    bp = _round_up(batch, tb)
    if bp != batch:
        # Zero-pad the batch columns; padded columns only see bias-only tanh
        # values and are dropped by the final slice (harmless by design).
        xt = jnp.pad(xt, ((0, 0), (0, bp - batch)))
    out = _critic_columns(xt, w1, b1, w2, b2, w3, b3, tb)
    return out[0, :batch].reshape(batch, 1)


@functools.partial(jax.jit, static_argnames=("block_batch",))
def gaussian_critic_forward(x, w1, b1, w2, b2, w3, b3, *, block_batch=None):
    """PyTorch-layout forward: value = L3(tanh(L2(tanh(L1(x))))) -> (B, 1).

    x is (B, state_dim) as in the nn.Module; weights follow nn.Linear:
      w1: (H, S), b1: (H,), w2: (H, H), b2: (H,), w3: (1, H), b3: (1,)
    The single transpose to batch-on-lanes happens here; prefer
    gaussian_critic_forward_t if the caller can hand over (S, B) directly.
    """
    return gaussian_critic_forward_t(x.T, w1, b1, w2, b2, w3, b3,
                                     block_batch=block_batch)


def init_params(key, state_dim, hidden_size):
    """PyTorch-style nn.Linear init: U(-1/sqrt(fan_in), +1/sqrt(fan_in)).

    Weights are stored (out_features, in_features), biases (out_features,),
    exactly like torch.nn.Linear.
    """
    def linear(k, fan_in, fan_out):
        kw, kb = jax.random.split(k)
        bound = 1.0 / (float(fan_in) ** 0.5)
        w = jax.random.uniform(kw, (fan_out, fan_in), jnp.float32, -bound, bound)
        b = jax.random.uniform(kb, (fan_out,), jnp.float32, -bound, bound)
        return w, b

    k1, k2, k3 = jax.random.split(key, 3)
    w1, b1 = linear(k1, state_dim, hidden_size)
    w2, b2 = linear(k2, hidden_size, hidden_size)
    w3, b3 = linear(k3, hidden_size, 1)
    return w1, b1, w2, b2, w3, b3


def _reference(x, w1, b1, w2, b2, w3, b3):
    """Plain-JAX reference of the same math (PyTorch layout: y = x @ W.T + b)."""
    h = jnp.tanh(x @ w1.T + b1)
    h = jnp.tanh(h @ w2.T + b2)
    return h @ w3.T + b3


if __name__ == "__main__":
    state_dim = 4
    hidden_size = 32
    batch = 2

    key = jax.random.PRNGKey(0)
    k_params, k_x, k_x2 = jax.random.split(key, 3)
    w1, b1, w2, b2, w3, b3 = init_params(k_params, state_dim, hidden_size)

    is_bf16 = _compute_dtype(_device_kind()) == jnp.bfloat16
    tol = 5e-2 if is_bf16 else 1e-5

    # Small-batch check (matches the PyTorch module's typical usage).
    x = jax.random.normal(k_x, (batch, state_dim), jnp.float32)
    value = gaussian_critic_forward(x, w1, b1, w2, b2, w3, b3)
    value = jax.block_until_ready(value)
    ref = _reference(x, w1, b1, w2, b2, w3, b3)
    assert value.shape == (batch, 1)
    assert jnp.allclose(value, ref, atol=tol, rtol=tol), (value, ref)

    # Multi-tile smoke test: forces several grid steps plus batch padding so
    # the tiled/parallel path is exercised (loose tolerance - it only needs to
    # catch mis-tiled blocks, not re-check bf16 numerics).
    batch2 = 300
    x2 = jax.random.normal(k_x2, (batch2, state_dim), jnp.float32)
    value2 = gaussian_critic_forward(x2, w1, b1, w2, b2, w3, b3,
                                     block_batch=128)
    value2 = jax.block_until_ready(value2)
    ref2 = _reference(x2, w1, b1, w2, b2, w3, b3)
    tol2 = 1e-1 if is_bf16 else 1e-5
    assert value2.shape == (batch2, 1)
    assert jnp.allclose(value2, ref2, atol=tol2, rtol=tol2)

    print("KERNEL_OK")
</pallas_src>

<mosaic_0001>
module attributes {stable_mosaic.version = 11 : i64} {
  func.func @_mlp_critic_kernel(%arg0: i32, %arg1: memref<4x128xf32, #tpu.memory_space<vmem>>, %arg2: memref<32x4xf32, #tpu.memory_space<vmem>>, %arg3: memref<32x1xf32, #tpu.memory_space<vmem>>, %arg4: memref<32x32xf32, #tpu.memory_space<vmem>>, %arg5: memref<32x1xf32, #tpu.memory_space<vmem>>, %arg6: memref<32x1xf32, #tpu.memory_space<vmem>>, %arg7: memref<1xf32, #tpu.memory_space<smem>>, %arg8: memref<1x128xf32, #tpu.memory_space<vmem>>) attributes {dimension_semantics = [#tpu.dimension_semantics<parallel>], iteration_bounds = array<i64: 1>, scalar_prefetch = 0 : i64, scratch_operands = 0 : i64, tpu.core_type = #tpu.core_type<tc>, window_params = [{transform_indices = @transform_0, window_bounds = array<i64: 4, 128>}, {pipeline_mode = #tpu.pipeline_mode<synchronous>, transform_indices = @transform_1, window_bounds = array<i64: 32, 4>}, {pipeline_mode = #tpu.pipeline_mode<synchronous>, transform_indices = @transform_2, window_bounds = array<i64: 32, 1>}, {pipeline_mode = #tpu.pipeline_mode<synchronous>, transform_indices = @transform_3, window_bounds = array<i64: 32, 32>}, {pipeline_mode = #tpu.pipeline_mode<synchronous>, transform_indices = @transform_4, window_bounds = array<i64: 32, 1>}, {pipeline_mode = #tpu.pipeline_mode<synchronous>, transform_indices = @transform_5, window_bounds = array<i64: 32, 1>}, {transform_indices = @transform_6, window_bounds = array<i64: 1>}, {transform_indices = @transform_7, window_bounds = array<i64: 1, 128>}]} {
    %c0 = arith.constant 0 : index
    %c0_0 = arith.constant 0 : index
    %0 = vector.load %arg1[%c0, %c0_0] : memref<4x128xf32, #tpu.memory_space<vmem>>, vector<4x128xf32>
    %c0_1 = arith.constant 0 : index
    %c0_2 = arith.constant 0 : index
    %1 = vector.load %arg2[%c0_1, %c0_2] : memref<32x4xf32, #tpu.memory_space<vmem>>, vector<32x4xf32>
    %c0_3 = arith.constant 0 : index
    %c0_4 = arith.constant 0 : index
    %2 = vector.load %arg4[%c0_3, %c0_4] : memref<32x32xf32, #tpu.memory_space<vmem>>, vector<32x32xf32>
    %3 = vector.extract_strided_slice %1 {offsets = [0, 0], sizes = [32, 1], strides = [1, 1]} : vector<32x4xf32> to vector<32x1xf32>
    %4 = vector.extract_strided_slice %0 {offsets = [0, 0], sizes = [1, 128], strides = [1, 1]} : vector<4x128xf32> to vector<1x128xf32>
    %5 = vector.broadcast %3 : vector<32x1xf32> to vector<32x128xf32>
    %6 = vector.broadcast %4 : vector<1x128xf32> to vector<32x128xf32>
    %7 = arith.mulf %5, %6 : vector<32x128xf32>
    %c0_5 = arith.constant 0 : index
    %c0_6 = arith.constant 0 : index
    %8 = vector.load %arg3[%c0_5, %c0_6] : memref<32x1xf32, #tpu.memory_space<vmem>>, vector<32x1xf32>
    %9 = vector.broadcast %8 : vector<32x1xf32> to vector<32x128xf32>
    %10 = arith.addf %7, %9 : vector<32x128xf32>
    %11 = vector.extract_strided_slice %1 {offsets = [0, 1], sizes = [32, 1], strides = [1, 1]} : vector<32x4xf32> to vector<32x1xf32>
    %12 = vector.extract_strided_slice %0 {offsets = [1, 0], sizes = [1, 128], strides = [1, 1]} : vector<4x128xf32> to vector<1x128xf32>
    %13 = vector.broadcast %11 : vector<32x1xf32> to vector<32x128xf32>
    %14 = vector.broadcast %12 : vector<1x128xf32> to vector<32x128xf32>
    %15 = arith.mulf %13, %14 : vector<32x128xf32>
    %16 = arith.addf %10, %15 : vector<32x128xf32>
    %17 = vector.extract_strided_slice %1 {offsets = [0, 2], sizes = [32, 1], strides = [1, 1]} : vector<32x4xf32> to vector<32x1xf32>
    %18 = vector.extract_strided_slice %0 {offsets = [2, 0], sizes = [1, 128], strides = [1, 1]} : vector<4x128xf32> to vector<1x128xf32>
    %19 = vector.broadcast %17 : vector<32x1xf32> to vector<32x128xf32>
    %20 = vector.broadcast %18 : vector<1x128xf32> to vector<32x128xf32>
    %21 = arith.mulf %19, %20 : vector<32x128xf32>
    %22 = arith.addf %16, %21 : vector<32x128xf32>
    %23 = vector.extract_strided_slice %1 {offsets = [0, 3], sizes = [32, 1], strides = [1, 1]} : vector<32x4xf32> to vector<32x1xf32>
    %24 = vector.extract_strided_slice %0 {offsets = [3, 0], sizes = [1, 128], strides = [1, 1]} : vector<4x128xf32> to vector<1x128xf32>
    %25 = vector.broadcast %23 : vector<32x1xf32> to vector<32x128xf32>
    %26 = vector.broadcast %24 : vector<1x128xf32> to vector<32x128xf32>
    %27 = arith.mulf %25, %26 : vector<32x128xf32>
    %28 = arith.addf %22, %27 : vector<32x128xf32>
    %29 = math.tanh %28 : vector<32x128xf32>
    %cst = arith.constant dense<0.000000e+00> : vector<32x128xf32>
    %30 = tpu.matmul %2, %29, %cst {dimension_numbers = #tpu.dot_dimension_numbers<[1], [0], [0], [1], [0, 0, 1, 1], [], []>} : vector<32x32xf32>, vector<32x128xf32>, vector<32x128xf32> -> vector<32x128xf32>
    %c0_7 = arith.constant 0 : index
    %c0_8 = arith.constant 0 : index
    %31 = vector.load %arg5[%c0_7, %c0_8] : memref<32x1xf32, #tpu.memory_space<vmem>>, vector<32x1xf32>
    %32 = vector.broadcast %31 : vector<32x1xf32> to vector<32x128xf32>
    %33 = arith.addf %30, %32 : vector<32x128xf32>
    %34 = math.tanh %33 : vector<32x128xf32>
    %c0_9 = arith.constant 0 : index
    %c0_10 = arith.constant 0 : index
    %35 = vector.load %arg6[%c0_9, %c0_10] : memref<32x1xf32, #tpu.memory_space<vmem>>, vector<32x1xf32>
    %36 = vector.broadcast %35 : vector<32x1xf32> to vector<32x128xf32>
    %37 = arith.mulf %34, %36 : vector<32x128xf32>
    %cst_11 = arith.constant dense<0.000000e+00> : vector<128xf32>
    %38 = vector.multi_reduction <add>, %37, %cst_11 [0] : vector<32x128xf32> to vector<128xf32>
    %39 = vector.shape_cast %38 : vector<128xf32> to vector<1x128xf32>
    %c0_12 = arith.constant 0 : index
    %40 = memref.load %arg7[%c0_12] : memref<1xf32, #tpu.memory_space<smem>>
    %41 = vector.broadcast %40 : f32 to vector<1x128xf32>
    %42 = arith.addf %39, %41 : vector<1x128xf32>
    %c0_13 = arith.constant 0 : index
    %c0_14 = arith.constant 0 : index
    %43 = vector.load %arg8[%c0_13, %c0_14] : memref<1x128xf32, #tpu.memory_space<vmem>>, vector<1x128xf32>
    tpu.vector_store %arg8[%c0_13, %c0_14], %42 {strides = array<i32>} : memref<1x128xf32, #tpu.memory_space<vmem>>, vector<1x128xf32>,
    return
  }
  func.func @transform_0(%arg0: i32) -> (i32, i32) {
    %c0_i32 = arith.constant 0 : i32
    %c0_i32_0 = arith.constant 0 : i32
    return %c0_i32, %arg0 : i32, i32
  }
  func.func @transform_1(%arg0: i32) -> (i32, i32) {
    %c0_i32 = arith.constant 0 : i32
    %c0_i32_0 = arith.constant 0 : i32
    %c0_i32_1 = arith.constant 0 : i32
    return %c0_i32, %c0_i32_0 : i32, i32
  }
  func.func @transform_2(%arg0: i32) -> (i32, i32) {
    %c0_i32 = arith.constant 0 : i32
    %c0_i32_0 = arith.constant 0 : i32
    %c0_i32_1 = arith.constant 0 : i32
    return %c0_i32, %c0_i32_0 : i32, i32
  }
  func.func @transform_3(%arg0: i32) -> (i32, i32) {
    %c0_i32 = arith.constant 0 : i32
    %c0_i32_0 = arith.constant 0 : i32
    %c0_i32_1 = arith.constant 0 : i32
    return %c0_i32, %c0_i32_0 : i32, i32
  }
  func.func @transform_4(%arg0: i32) -> (i32, i32) {
    %c0_i32 = arith.constant 0 : i32
    %c0_i32_0 = arith.constant 0 : i32
    %c0_i32_1 = arith.constant 0 : i32
    return %c0_i32, %c0_i32_0 : i32, i32
  }
  func.func @transform_5(%arg0: i32) -> (i32, i32) {
    %c0_i32 = arith.constant 0 : i32
    %c0_i32_0 = arith.constant 0 : i32
    %c0_i32_1 = arith.constant 0 : i32
    return %c0_i32, %c0_i32_0 : i32, i32
  }
  func.func @transform_6(%arg0: i32) -> i32 {
    %c0_i32 = arith.constant 0 : i32
    %c0_i32_0 = arith.constant 0 : i32
    return %c0_i32 : i32
  }
  func.func @transform_7(%arg0: i32) -> (i32, i32) {
    %c0_i32 = arith.constant 0 : i32
    %c0_i32_0 = arith.constant 0 : i32
    return %c0_i32, %arg0 : i32, i32
  }
}

</mosaic_0001>

<llo_original>
// kernel: gaussian_critic_forward_t.1
$region0: #{gaussian_critic_forward_t.1}
  #allocation0 [shape = 'u32[]', space=smem, size = 0x4, offset = 0x4, fixed_abs, tag = 'smem constant byte address 0x4 - core index']
  #allocation1 [shape = 'u32[144,128]{1,0:T(1,128)}', space=vmem, size = 0x12000, scoped, tag = 'internal scratch']
  #allocation2 [shape = 'f32[1]{0:T(128)S(6)}', space=smem, size = 0x200, scoped, tag = 'scoped memory for gaussian_critic_forward_t.1']
  %s0 = inlined_call_operand.hbm [shape: f32[4,128], index: 0, kind: input, shape index: {}]
  %s1 = inlined_call_operand.hbm [shape: f32[32,4], index: 1, kind: input, shape index: {}]
  %s2 = inlined_call_operand.hbm [shape: f32[32,1], index: 2, kind: input, shape index: {}]
  %s3 = inlined_call_operand.hbm [shape: f32[32,32], index: 3, kind: input, shape index: {}]
  %s4 = inlined_call_operand.hbm [shape: f32[32,1], index: 4, kind: input, shape index: {}]
  %s5 = inlined_call_operand.hbm [shape: f32[32,1], index: 5, kind: input, shape index: {}]
  %s6 = inlined_call_operand.<no memory space> [shape: f32[1], index: 6, kind: input, shape index: {}]
  %s7 = inlined_call_operand.hbm [shape: f32[1,128], index: 7, kind: output, shape index: {}]
  %s8 = sld [smem:[#allocation0]]
  $region62: #{gaussian_critic_forward_t.1} parent=0
    _
  %s10 = ssub.s32 1, %s8
  %s11 = scalar_select 0, %s10, %s8
  %12 = sst [smem:[#allocation2]] %s6
  $region1: #{gaussian_critic_forward_t.1} parent=0
    #allocation3 [shape = 'u8[2048]{0}', space=vmem, size = 0x800, scoped, tag = 'input window, operand 0, single buffered']
    #allocation4 [shape = 's32[1]{0}', space=sflag, size = 0x4, scoped, tag = 'scoped memory for gaussian_critic_forward_t.1']
    #allocation5 [shape = 's32[1]{0}', space=sflag, size = 0x4, scoped, tag = 'scoped memory for gaussian_critic_forward_t.1']
    #allocation6 [shape = 'u8[16384]{0}', space=vmem, size = 0x4000, scoped, tag = 'input window, operand 1, single buffered']
    #allocation7 [shape = 's32[1]{0}', space=sflag, size = 0x4, scoped, tag = 'scoped memory for gaussian_critic_forward_t.1']
    #allocation8 [shape = 'u8[16384]{0}', space=vmem, size = 0x4000, scoped, tag = 'input window, operand 2, single buffered']
    #allocation9 [shape = 'u8[16384]{0}', space=vmem, size = 0x4000, scoped, tag = 'input window, operand 3, single buffered']
    #allocation10 [shape = 's32[1]{0}', space=sflag, size = 0x4, scoped, tag = 'scoped memory for gaussian_critic_forward_t.1']
    #allocation11 [shape = 'u8[16384]{0}', space=vmem, size = 0x4000, scoped, tag = 'input window, operand 4, single buffered']
    #allocation12 [shape = 'u8[16384]{0}', space=vmem, size = 0x4000, scoped, tag = 'input window, operand 5, single buffered']
    #allocation13 [shape = 's32[1]{0}', space=sflag, size = 0x4, scoped, tag = 'scoped memory for gaussian_critic_forward_t.1']
    #allocation14 [shape = 'u8[512]{0}', space=vmem, size = 0x400, scoped, tag = 'output window, operand 0, single buffered']
    %13 = vsyncpa [#allocation4], 0
    %14 = vsyncpa [#allocation7], 0
    %15 = vsyncpa [#allocation10], 0
    %16 = vsyncpa [#allocation13], 0
    %17 = vsyncpa [#allocation5], 0
    // Predicated region
    $region2: #{gaussian_critic_forward_t.1} parent=1 // pred_check
      _
    $region3: #{gaussian_critic_forward_t.1} parent=1 // pred_check_branch
      %19 = sbr.rel (0) target = $region5
    $region4: #{gaussian_critic_forward_t.1} parent=1 // pred_region
      %s21 = ssub.s32 64, 64
      %22 = vsyncadd [#allocation4], %s21
      %s24 = sshll.u32 [#allocation3], 4
      %s25 = int_to_ptr.vmem [resolvable:$true] %s24
      %27 = dma.hbm_to_vmem [thread:$0]  %s0, 64, %s25, [#allocation4]
    $region5: #{gaussian_critic_forward_t.1} parent=1 // pred_fallthru
      _
    // Predicated region
    $region6: #{gaussian_critic_forward_t.1} parent=1 // pred_check
      _
    $region7: #{gaussian_critic_forward_t.1} parent=1 // pred_check_branch
      %29 = sbr.rel (0) target = $region9
    $region8: #{gaussian_critic_forward_t.1} parent=1 // pred_region
      %s31 = ssub.s32 512, 512
      %32 = vsyncadd [#allocation7], %s31
      %s33 = sshll.u32 [#allocation6], 4
      %s34 = int_to_ptr.vmem [resolvable:$true] %s33
      %39 = dma.hbm_to_vmem [thread:$0]  %s1, 512, %s34, [#allocation7], 128, 128, 8
    $region9: #{gaussian_critic_forward_t.1} parent=1 // pred_fallthru
      _
    // Predicated region
    $region10: #{gaussian_critic_forward_t.1} parent=1 // pred_check
      _
    $region11: #{gaussian_critic_forward_t.1} parent=1 // pred_check_branch
      %41 = sbr.rel (0) target = $region13
    $region12: #{gaussian_critic_forward_t.1} parent=1 // pred_region
      %s43 = ssub.s32 512, 512
      %44 = vsyncadd [#allocation7], %s43
      %s45 = sshll.u32 [#allocation8], 4
      %s46 = int_to_ptr.vmem [resolvable:$true] %s45
      %51 = dma.hbm_to_vmem [thread:$0]  %s2, 512, %s46, [#allocation7], 128, 128, 8
    $region13: #{gaussian_critic_forward_t.1} parent=1 // pred_fallthru
      _
    // Predicated region
    $region14: #{gaussian_critic_forward_t.1} parent=1 // pred_check
      _
    $region15: #{gaussian_critic_forward_t.1} parent=1 // pred_check_branch
      %53 = sbr.rel (0) target = $region17
    $region16: #{gaussian_critic_forward_t.1} parent=1 // pred_region
      %s55 = ssub.s32 512, 512
      %56 = vsyncadd [#allocation10], %s55
      %s57 = sshll.u32 [#allocation9], 4
      %s58 = int_to_ptr.vmem [resolvable:$true] %s57
      %63 = dma.hbm_to_vmem [thread:$0]  %s3, 512, %s58, [#allocation10], 128, 128, 8
    $region17: #{gaussian_critic_forward_t.1} parent=1 // pred_fallthru
      _
    // Predicated region
    $region18: #{gaussian_critic_forward_t.1} parent=1 // pred_check
      _
    $region19: #{gaussian_critic_forward_t.1} parent=1 // pred_check_branch
      %65 = sbr.rel (0) target = $region21
    $region20: #{gaussian_critic_forward_t.1} parent=1 // pred_region
      %s67 = ssub.s32 512, 512
      %68 = vsyncadd [#allocation10], %s67
      %s69 = sshll.u32 [#allocation11], 4
      %s70 = int_to_ptr.vmem [resolvable:$true] %s69
      %75 = dma.hbm_to_vmem [thread:$0]  %s4, 512, %s70, [#allocation10], 128, 128, 8
    $region21: #{gaussian_critic_forward_t.1} parent=1 // pred_fallthru
      _
    // Predicated region
    $region22: #{gaussian_critic_forward_t.1} parent=1 // pred_check
      _
    $region23: #{gaussian_critic_forward_t.1} parent=1 // pred_check_branch
      %77 = sbr.rel (0) target = $region25
    $region24: #{gaussian_critic_forward_t.1} parent=1 // pred_region
      %s79 = ssub.s32 512, 512
      %80 = vsyncadd [#allocation13], %s79
      %s81 = sshll.u32 [#allocation12], 4
      %s82 = int_to_ptr.vmem [resolvable:$true] %s81
      %87 = dma.hbm_to_vmem [thread:$0]  %s5, 512, %s82, [#allocation13], 128, 128, 8
    $region25: #{gaussian_critic_forward_t.1} parent=1 // pred_fallthru
      _
    // Predicated region
    $region26: #{gaussian_critic_forward_t.1} parent=1 // pred_check
      _
    $region27: #{gaussian_critic_forward_t.1} parent=1 // pred_check_branch
      %89 = sbr.rel (0) target = $region29
    $region28: #{gaussian_critic_forward_t.1} parent=1 // pred_region
      _
    $region29: #{gaussian_critic_forward_t.1} parent=1 // pred_fallthru
      _
    // Predicated region
    $region30: #{gaussian_critic_forward_t.1} parent=1 // pred_check
      _
    $region31: #{gaussian_critic_forward_t.1} parent=1 // pred_check_branch
      %91 = sbr.rel (0) target = $region33
    $region32: #{gaussian_critic_forward_t.1} parent=1 // pred_region
      %92 = dma.done [#allocation4], 64
    $region33: #{gaussian_critic_forward_t.1} parent=1 // pred_fallthru
      _
    // Predicated region
    $region34: #{gaussian_critic_forward_t.1} parent=1 // pred_check
      _
    $region35: #{gaussian_critic_forward_t.1} parent=1 // pred_check_branch
      %94 = sbr.rel (0) target = $region37
    $region36: #{gaussian_critic_forward_t.1} parent=1 // pred_region
      %95 = dma.done [#allocation7], 512
    $region37: #{gaussian_critic_forward_t.1} parent=1 // pred_fallthru
      _
    // Predicated region
    $region38: #{gaussian_critic_forward_t.1} parent=1 // pred_check
      _
    $region39: #{gaussian_critic_forward_t.1} parent=1 // pred_check_branch
      %97 = sbr.rel (0) target = $region41
    $region40: #{gaussian_critic_forward_t.1} parent=1 // pred_region
      %98 = dma.done [#allocation7], 512
    $region41: #{gaussian_critic_forward_t.1} parent=1 // pred_fallthru
      _
    // Predicated region
    $region42: #{gaussian_critic_forward_t.1} parent=1 // pred_check
      _
    $region43: #{gaussian_critic_forward_t.1} parent=1 // pred_check_branch
      %100 = sbr.rel (0) target = $region45
    $region44: #{gaussian_critic_forward_t.1} parent=1 // pred_region
      %101 = dma.done [#allocation10], 512
    $region45: #{gaussian_critic_forward_t.1} parent=1 // pred_fallthru
      _
    // Predicated region
    $region46: #{gaussian_critic_forward_t.1} parent=1 // pred_check
      _
    $region47: #{gaussian_critic_forward_t.1} parent=1 // pred_check_branch
      %103 = sbr.rel (0) target = $region49
    $region48: #{gaussian_critic_forward_t.1} parent=1 // pred_region
      %104 = dma.done [#allocation10], 512
    $region49: #{gaussian_critic_forward_t.1} parent=1 // pred_fallthru
      _
    // Predicated region
    $region50: #{gaussian_critic_forward_t.1} parent=1 // pred_check
      _
    $region51: #{gaussian_critic_forward_t.1} parent=1 // pred_check_branch
      %106 = sbr.rel (0) target = $region53
    $region52: #{gaussian_critic_forward_t.1} parent=1 // pred_region
      %107 = dma.done [#allocation13], 512
    $region53: #{gaussian_critic_forward_t.1} parent=1 // pred_fallthru
      _
    %v108 = vld [vmem:[#allocation3] sm:$0xf]
    %v109 = vld [vmem:[#allocation6] sm:$0xff]
    %v110 = vld [vmem:[#allocation6 + $0x8] sm:$0xff]
    %v111 = vld [vmem:[#allocation6 + $0x10] sm:$0xff]
    %v112 = vld [vmem:[#allocation6 + $0x18] sm:$0xff]
    %v113 = vld [vmem:[#allocation9] sm:$0xff]
    %v114 = vld [vmem:[#allocation9 + $0x8] sm:$0xff]
    %v115 = vld [vmem:[#allocation9 + $0x10] sm:$0xff]
    %v116 = vld [vmem:[#allocation9 + $0x18] sm:$0xff]
    %118 = vset.pattern.permute.xlu0 0
    %119 = vperm.xlu0 %118, %v109
    %v120 = vpop.permute.xlu0 %119
    %123 = vset.pattern.permute.xlu0 0
    %124 = vperm.xlu0 %123, %v110
    %v125 = vpop.permute.xlu0 %124
    %128 = vset.pattern.permute.xlu0 0
    %129 = vperm.xlu0 %128, %v111
    %v130 = vpop.permute.xlu0 %129
    %133 = vset.pattern.permute.xlu0 0
    %134 = vperm.xlu0 %133, %v112
    %v135 = vpop.permute.xlu0 %134
    %v137 = vlaneseq
    %v138 = vshrl.u32 %v137, 7
    %v139 = vsub.s32 0, %v138
    %v140 = vrot.slane %v108, %v139
    %v141 = vmul.f32 %v120, %v140
    %v142 = vmul.f32 %v125, %v140
    %v143 = vmul.f32 %v130, %v140
    %v144 = vmul.f32 %v135, %v140
    %v145 = vld [vmem:[#allocation8] sm:$0xff]
    %v146 = vld [vmem:[#allocation8 + $0x8] sm:$0xff]
    %v147 = vld [vmem:[#allocation8 + $0x10] sm:$0xff]
    %v148 = vld [vmem:[#allocation8 + $0x18] sm:$0xff]
    %150 = vset.pattern.permute.xlu0 0
    %151 = vperm.xlu0 %150, %v145
    %v152 = vpop.permute.xlu0 %151
    %155 = vset.pattern.permute.xlu0 0
    %156 = vperm.xlu0 %155, %v146
    %v157 = vpop.permute.xlu0 %156
    %160 = vset.pattern.permute.xlu0 0
    %161 = vperm.xlu0 %160, %v147
    %v162 = vpop.permute.xlu0 %161
    %165 = vset.pattern.permute.xlu0 0
    %166 = vperm.xlu0 %165, %v148
    %v167 = vpop.permute.xlu0 %166
    %v169 = vadd.f32 %v141, %v152
    %v170 = vadd.f32 %v142, %v157
    %v171 = vadd.f32 %v143, %v162
    %v172 = vadd.f32 %v144, %v167
    %173 = vset.pattern.permute.xlu0 1
    %174 = vperm.xlu0 %173, %v109
    %v175 = vpop.permute.xlu0 %174
    %177 = vset.pattern.permute.xlu0 1
    %178 = vperm.xlu0 %177, %v110
    %v179 = vpop.permute.xlu0 %178
    %181 = vset.pattern.permute.xlu0 1
    %182 = vperm.xlu0 %181, %v111
    %v183 = vpop.permute.xlu0 %182
    %185 = vset.pattern.permute.xlu0 1
    %186 = vperm.xlu0 %185, %v112
    %v187 = vpop.permute.xlu0 %186
    %v189 = vlaneseq
    %v190 = vshrl.u32 %v189, 7
    %v191 = vsub.s32 1, %v190
    %v192 = vrot.slane %v108, %v191
    %v193 = vmul.f32 %v175, %v192
    %v194 = vmul.f32 %v179, %v192
    %v195 = vmul.f32 %v183, %v192
    %v196 = vmul.f32 %v187, %v192
    %v197 = vadd.f32 %v169, %v193
    %v198 = vadd.f32 %v170, %v194
    %v199 = vadd.f32 %v171, %v195
    %v200 = vadd.f32 %v172, %v196
    %201 = vset.pattern.permute.xlu0 2
    %202 = vperm.xlu0 %201, %v109
    %v203 = vpop.permute.xlu0 %202
    %205 = vset.pattern.permute.xlu0 2
    %206 = vperm.xlu0 %205, %v110
    %v207 = vpop.permute.xlu0 %206
    %209 = vset.pattern.permute.xlu0 2
    %210 = vperm.xlu0 %209, %v111
    %v211 = vpop.permute.xlu0 %210
    %213 = vset.pattern.permute.xlu0 2
    %214 = vperm.xlu0 %213, %v112
    %v215 = vpop.permute.xlu0 %214
    %v217 = vlaneseq
    %v218 = vshrl.u32 %v217, 7
    %v219 = vsub.s32 2, %v218
    %v220 = vrot.slane %v108, %v219
    %v221 = vmul.f32 %v203, %v220
    %v222 = vmul.f32 %v207, %v220
    %v223 = vmul.f32 %v211, %v220
    %v224 = vmul.f32 %v215, %v220
    %v225 = vadd.f32 %v197, %v221
    %v226 = vadd.f32 %v198, %v222
    %v227 = vadd.f32 %v199, %v223
    %v228 = vadd.f32 %v200, %v224
    %229 = vset.pattern.permute.xlu0 3
    %230 = vperm.xlu0 %229, %v109
    %v231 = vpop.permute.xlu0 %230
    %233 = vset.pattern.permute.xlu0 3
    %234 = vperm.xlu0 %233, %v110
    %v235 = vpop.permute.xlu0 %234
    %237 = vset.pattern.permute.xlu0 3
    %238 = vperm.xlu0 %237, %v111
    %v239 = vpop.permute.xlu0 %238
    %241 = vset.pattern.permute.xlu0 3
    %242 = vperm.xlu0 %241, %v112
    %v243 = vpop.permute.xlu0 %242
    %v245 = vlaneseq
    %v246 = vshrl.u32 %v245, 7
    %v247 = vsub.s32 3, %v246
    %v248 = vrot.slane %v108, %v247
    %v249 = vmul.f32 %v231, %v248
    %v250 = vmul.f32 %v235, %v248
    %v251 = vmul.f32 %v239, %v248
    %v252 = vmul.f32 %v243, %v248
    %v253 = vadd.f32 %v225, %v249
    %v254 = vadd.f32 %v226, %v250
    %v255 = vadd.f32 %v227, %v251
    %v256 = vadd.f32 %v228, %v252
    %v257 = vtanh.pop %v253
    %v258 = vtanh.pop %v254
    %v259 = vtanh.pop %v255
    %v260 = vtanh.pop %v256
    %v261 = vld [vmem:[#allocation11] sm:$0xff]
    %v262 = vld [vmem:[#allocation11 + $0x8] sm:$0xff]
    %v263 = vld [vmem:[#allocation11 + $0x10] sm:$0xff]
    %v264 = vld [vmem:[#allocation11 + $0x18] sm:$0xff]
    %266 = vset.pattern.permute.xlu0 0
    %267 = vperm.xlu0 %266, %v261
    %v268 = vpop.permute.xlu0 %267
    %271 = vset.pattern.permute.xlu0 0
    %272 = vperm.xlu0 %271, %v262
    %v273 = vpop.permute.xlu0 %272
    %276 = vset.pattern.permute.xlu0 0
    %277 = vperm.xlu0 %276, %v263
    %v278 = vpop.permute.xlu0 %277
    %281 = vset.pattern.permute.xlu0 0
    %282 = vperm.xlu0 %281, %v264
    %v283 = vpop.permute.xlu0 %282
    %vm285 = vcmask 261120
    %v287 = vsel %vm285, %v113, 0
    %v290 = vsel %vm285, %v114, 0
    %v293 = vsel %vm285, %v115, 0
    %v296 = vsel %vm285, %v116, 0
    %298 = vmatprep.subr.mxu0 0.0
    %299 = vmatpush1.msra.mxu0 %v257
    %300 = vmatprep.subr.mxu0 0.0
    %301 = vmatpush1.msra.mxu0 %v258
    %302 = vmatprep.subr.mxu0 0.0
    %303 = vmatpush1.msra.mxu0 %v259
    %304 = vmatprep.subr.mxu0 0.0
    %305 = vmatpush1.msra.mxu0 %v260
    %306 = vmatprep.subr.mxu0 0.0
    %307 = vmatpush1.msra.mxu0 0.0
    %308 = vmatprep.subr.mxu0 0.0
    %309 = vmatpush1.msra.mxu0 0.0
    %310 = vmatprep.subr.mxu0 0.0
    %311 = vmatpush1.msra.mxu0 0.0
    %312 = vmatprep.subr.mxu0 0.0
    %313 = vmatpush1.msra.mxu0 0.0
    %314 = vmatprep.subr.mxu0 0.0
    %315 = vmatpush1.msra.mxu0 0.0
    %316 = vmatprep.subr.mxu0 0.0
    %317 = vmatpush1.msra.mxu0 0.0
    %318 = vmatprep.subr.mxu0 0.0
    %319 = vmatpush1.msra.mxu0 0.0
    %320 = vmatprep.subr.mxu0 0.0
    %321 = vmatpush1.msra.mxu0 0.0
    %322 = vmatprep.subr.mxu0 0.0
    %323 = vmatpush1.msra.mxu0 0.0
    %324 = vmatprep.subr.mxu0 0.0
    %325 = vmatpush1.msra.mxu0 0.0
    %326 = vmatprep.subr.mxu0 0.0
    %327 = vmatpush1.msra.mxu0 0.0
    %328 = vmatprep.subr.mxu0 0.0
    %329 = vmatpush1.msra.mxu0 0.0
    %330 = vmatprep.subr.mxu0 0.0
    %331 = vmatpush1.msra.mxu0 0.0
    %332 = vmatprep.subr.mxu0 0.0
    %333 = vmatpush1.msra.mxu0 0.0
    %334 = vmatprep.subr.mxu0 0.0
    %335 = vmatpush1.msra.mxu0 0.0
    %336 = vmatprep.subr.mxu0 0.0
    %337 = vmatpush1.msra.mxu0 0.0
    %338 = vmatprep.subr.mxu0 0.0
    %339 = vmatpush1.msra.mxu0 0.0
    %340 = vmatprep.subr.mxu0 0.0
    %341 = vmatpush1.msra.mxu0 0.0
    %342 = vmatprep.subr.mxu0 0.0
    %343 = vmatpush1.msra.mxu0 0.0
    %344 = vmatprep.subr.mxu0 0.0
    %345 = vmatpush1.msra.mxu0 0.0
    %346 = vmatprep.subr.mxu0 0.0
    %347 = vmatpush1.msra.mxu0 0.0
    %348 = vmatprep.subr.mxu0 0.0
    %349 = vmatpush1.msra.mxu0 0.0
    %350 = vmatprep.subr.mxu0 0.0
    %351 = vmatpush1.msra.mxu0 0.0
    %352 = vmatprep.subr.mxu0 0.0
    %353 = vmatpush1.msra.mxu0 0.0
    %354 = vmatprep.subr.mxu0 0.0
    %355 = vmatpush1.msra.mxu0 0.0
    %356 = vmatprep.subr.mxu0 0.0
    %357 = vmatpush1.msra.mxu0 0.0
    %358 = vmatprep.subr.mxu0 0.0
    %359 = vmatpush1.msra.mxu0 0.0
    %360 = vmatprep.subr.mxu0 0.0
    %361 = vmatpush1.msra.mxu0 0.0
    %362 = vmatprep.mubr.f32.mxu0 0.0
    %363 = vmatmul.mubr.f32.gmra.mrb[0].mxu0 %v287
    %v364 = vpop.f32.mrb[0].mxu0
    %v365 = vadd.f32 %v268, %v364
    %v366 = vpop.f32.mrb[0].mxu0
    %367 = vmatprep.mubr.f32.mxu0 0.0
    %368 = vmatmul.mubr.f32.gmra.mrb[0].mxu0 %v290
    %v369 = vpop.f32.mrb[0].mxu0
    %v370 = vadd.f32 %v273, %v369
    %v371 = vpop.f32.mrb[0].mxu0
    %372 = vmatprep.mubr.f32.mxu0 0.0
    %373 = vmatmul.mubr.f32.gmra.mrb[0].mxu0 %v293
    %v374 = vpop.f32.mrb[0].mxu0
    %v375 = vadd.f32 %v278, %v374
    %v376 = vpop.f32.mrb[0].mxu0
    %377 = vmatprep.mubr.f32.mxu0 0.0
    %378 = vmatmul.mubr.f32.gmra.mrb[0].mxu0 %v296
    %v379 = vpop.f32.mrb[0].mxu0
    %v380 = vadd.f32 %v283, %v379
    %v381 = vpop.f32.mrb[0].mxu0
    %382 = vdwg.mxu0
    %v383 = vtanh.pop %v365
    %v384 = vtanh.pop %v370
    %v385 = vtanh.pop %v375
    %v386 = vtanh.pop %v380
    %v387 = vld [vmem:[#allocation12] sm:$0xff]
    %v388 = vld [vmem:[#allocation12 + $0x8] sm:$0xff]
    %v389 = vld [vmem:[#allocation12 + $0x10] sm:$0xff]
    %v390 = vld [vmem:[#allocation12 + $0x18] sm:$0xff]
    %392 = vset.pattern.permute.xlu0 0
    %393 = vperm.xlu0 %392, %v387
    %v394 = vpop.permute.xlu0 %393
    %397 = vset.pattern.permute.xlu0 0
    %398 = vperm.xlu0 %397, %v388
    %v399 = vpop.permute.xlu0 %398
    %402 = vset.pattern.permute.xlu0 0
    %403 = vperm.xlu0 %402, %v389
    %v404 = vpop.permute.xlu0 %403
    %407 = vset.pattern.permute.xlu0 0
    %408 = vperm.xlu0 %407, %v390
    %v409 = vpop.permute.xlu0 %408
    %v411 = vmul.f32 %v383, %v394
    %v412 = vmul.f32 %v384, %v399
    %v413 = vmul.f32 %v385, %v404
    %v414 = vmul.f32 %v386, %v409
    %v415 = vadd.f32 %v411, %v412
    %v416 = vadd.f32 %v415, %v413
    %v417 = vadd.f32 %v416, %v414
    %v418 = vrot.slane %v417, 4
    %v419 = vadd.f32 %v417, %v418
    %v420 = vrot.slane %v419, 2
    %v421 = vadd.f32 %v419, %v420
    %v422 = vrot.slane %v421, 1
    %v423 = vadd.f32 %v421, %v422
    %s424 = sld [smem:[#allocation2]]
    %v425 = vstv %s424
    %v426 = vadd.f32 %v423, %v425
    %427 = vst [vmem:[#allocation14] sm:$0x1] %v426
    // Predicated region
    $region54: #{gaussian_critic_forward_t.1} parent=1 // pred_check
      _
    $region55: #{gaussian_critic_forward_t.1} parent=1 // pred_check_branch
      %429 = sbr.rel (0) target = $region57
    $region56: #{gaussian_critic_forward_t.1} parent=1 // pred_region
      %s431 = ssub.s32 16, 16
      %432 = vsyncadd [#allocation5], %s431
      %s434 = sshll.u32 [#allocation14], 4
      %s435 = int_to_ptr.vmem [resolvable:$true] %s434
      %437 = dma.vmem_to_hbm [thread:$0]  %s435, 16, %s7, [#allocation5]
    $region57: #{gaussian_critic_forward_t.1} parent=1 // pred_fallthru
      _
    // Predicated region
    $region58: #{gaussian_critic_forward_t.1} parent=1 // pred_check
      _
    $region59: #{gaussian_critic_forward_t.1} parent=1 // pred_check_branch
      %439 = sbr.rel (0) target = $region61
    $region60: #{gaussian_critic_forward_t.1} parent=1 // pred_region
      %440 = dma.done [#allocation5], 16
    $region61: #{gaussian_critic_forward_t.1} parent=1 // pred_fallthru
      _
    %441 = vsyncpa [#allocation4], 1
    %442 = vsyncpa [#allocation7], 1
    %443 = vsyncpa [#allocation10], 1
    %444 = vsyncpa [#allocation13], 1
    %445 = vsyncpa [#allocation5], 1

</llo_original>
